<compile_context>
chip_gen: v5e
topology: v5e:2x2
jax: 0.10.0
libtpu: 0.0.40
codegen_flags: <defaults>
</compile_context>

<pallas_src>
import math

import jax
import jax.numpy as jnp
from jax.experimental import pallas as pl
from jax.experimental.pallas import tpu as pltpu


def _build_pe_table(max_len: int, dim: int) -> jnp.ndarray:
    """Deterministic sinusoidal PE buffer, same as the PyTorch __init__."""
    position = jnp.arange(max_len, dtype=jnp.float32)[:, None]              # [L, 1]
    div_term = jnp.exp(
        jnp.arange(0, dim, 2, dtype=jnp.float32) * (-math.log(10000.0) / dim)
    )                                                                        # [D/2]
    pe = jnp.zeros((max_len, dim), dtype=jnp.float32)
    pe = pe.at[:, 0::2].set(jnp.sin(position * div_term))
    pe = pe.at[:, 1::2].set(jnp.cos(position * div_term))
    return pe                                                                # [L, D]


def _temporal_encoding_kernel(x_ref, norm_ref, pe_ref, o_ref):
    # x_ref   : (1, TS, TD)  one batch element's (s, d) tile of features
    # norm_ref: (1, TS, 1)   f32 per-timestep scale (already (h*60+m)/1440)
    # pe_ref  : (TS, TD)     f32 shared PE tile (reused across the inner batch axis)
    # o_ref   : (1, TS, TD)
    x = x_ref[...].astype(jnp.float32)
    norm = norm_ref[...]                         # (1, TS, 1), broadcasts over TD
    pe = pe_ref[...][None, :, :]                 # (1, TS, TD)
    o_ref[...] = (x + pe * norm).astype(o_ref.dtype)


def _round_up(v: int, m: int) -> int:
    return (v + m - 1) // m * m


def _pick_tiles(B: int, S: int, D: int, itemsize: int,
                target_bytes: int = 4 << 20) -> tuple[int, int]:
    """Pick (ts, td) so one x tile is ~target_bytes and the grid has >=4 steps.

    ts/td are multiples of 128 (or the full dim), satisfying the (8,128)-or-full rule
    for every block in this kernel.
    """
    # Feature tile: only split D when a single 128-row slab would blow the budget.
    if D % 128 == 0 and 128 * D * itemsize > target_bytes:
        td = max(128, (target_bytes // (128 * itemsize)) // 128 * 128)
    else:
        td = D

    # Sequence tile.
    if S <= 128:
        ts = S
    else:
        ts = max(128, (target_bytes // max(td * itemsize, 1)) // 128 * 128)
        if ts > S:
            ts = S

    # Guarantee enough grid steps for 2 TensorCores (v7x) + DMA/compute overlap.
    min_steps = 4
    num_d = pl.cdiv(D, td)
    if S > 128 and B * num_d * pl.cdiv(S, ts) < min_steps:
        want_s_tiles = pl.cdiv(min_steps, B * num_d)
        cap = max(128, _round_up(pl.cdiv(S, want_s_tiles), 128))
        ts = min(ts, cap)

    return ts, td


def temporal_encoding(x: jnp.ndarray,
                      time_indices: jnp.ndarray,
                      pe_full: jnp.ndarray,
                      *,
                      seq_tile: int | None = None,
                      target_bytes: int = 4 << 20) -> jnp.ndarray:
    """x: [B, S, D]; time_indices: [B, S, 2] (hour, minute); pe_full: [max_len, D]."""
    B, S, D = x.shape
    if S > pe_full.shape[0]:
        raise ValueError(f"sequence length {S} exceeds PE table length {pe_full.shape[0]}")

    dtype = x.dtype
    itemsize = jnp.dtype(dtype).itemsize

    # Tiny scalar-per-(b,s) preprocessing in the wrapper (B*S elements, negligible
    # next to the B*S*D main traffic).  Kept in f32: no double rounding for bf16 x.
    t = time_indices.astype(jnp.float32)
    norm = ((t[:, :, 0] * 60.0 + t[:, :, 1]) * (1.0 / 1440.0))[:, :, None]   # [B, S, 1] f32
    pe_slice = pe_full[:S, :].astype(jnp.float32)                            # [S, D]  f32

    ts, td = _pick_tiles(B, S, D, itemsize, target_bytes)
    if seq_tile is not None:
        ts = seq_tile
    num_s = pl.cdiv(S, ts)
    num_d = pl.cdiv(D, td)
    grid = (num_s, num_d, B)   # b innermost -> pe tile reused across batch steps

    # Explicit VMEM budget: x/out (dtype), pe (f32), norm (lane-padded f32), all
    # double-buffered, plus headroom.  Clamped to 48 MiB (safe inside v7x's 64 MiB).
    tile_x = ts * td * itemsize
    tile_pe = ts * td * 4
    tile_norm = ts * 128 * 4
    vmem_needed = 2 * (2 * tile_x + tile_pe + tile_norm)
    vmem_limit = int(min(max(vmem_needed + (8 << 20), 16 << 20), 48 << 20))

    return pl.pallas_call(
        _temporal_encoding_kernel,
        out_shape=jax.ShapeDtypeStruct((B, S, D), dtype),
        grid_spec=pltpu.PrefetchScalarGridSpec(
            num_scalar_prefetch=0,
            grid=grid,
            in_specs=[
                pl.BlockSpec((1, ts, td), lambda s, d, b: (b, s, d)),   # x
                pl.BlockSpec((1, ts, 1), lambda s, d, b: (b, s, 0)),    # norm (const over d)
                pl.BlockSpec((ts, td), lambda s, d, b: (s, d)),         # pe   (const over b)
            ],
            out_specs=pl.BlockSpec((1, ts, td), lambda s, d, b: (b, s, d)),
        ),
        compiler_params=pltpu.CompilerParams(
            dimension_semantics=("parallel", "parallel", "parallel"),
            vmem_limit_bytes=vmem_limit,
        ),
    )(x, norm, pe_slice)


def temporal_encoding_ref(x, time_indices, pe_full):
    """Pure-JAX reference mirroring the PyTorch forward."""
    B, S, D = x.shape
    mod = time_indices[:, :, 0].astype(jnp.float32) * 60.0 \
        + time_indices[:, :, 1].astype(jnp.float32)
    norm = mod / 1440.0                                   # [B, S]
    pe = pe_full[None, :S, :] * norm[:, :, None]          # [B, S, D]
    return x + pe


if __name__ == "__main__":
    MAX_LEN = 1440
    key = jax.random.PRNGKey(0)

    # (B, S, D, explicit seq_tile)
    #   cfg 1: tiny, no tiling (full-dim blocks)
    #   cfg 2: explicit S-tiling + pe reuse across batch
    #   cfg 3: B=1 -> exercises the min-grid-steps guard (auto ts=128 -> 4 steps)
    configs = [(2, 8, 32, None), (2, 256, 128, 128), (1, 512, 128, None)]

    for (B, S, D, ts) in configs:
        kx, kh, km, key = jax.random.split(key, 4)
        x = jax.random.normal(kx, (B, S, D), dtype=jnp.float32)
        hours = jax.random.randint(kh, (B, S, 1), 0, 24, dtype=jnp.int32)
        minutes = jax.random.randint(km, (B, S, 1), 0, 60, dtype=jnp.int32)
        time_indices = jnp.concatenate([hours, minutes], axis=-1)     # [B, S, 2]

        pe_full = _build_pe_table(MAX_LEN, D)

        out = temporal_encoding(x, time_indices, pe_full, seq_tile=ts)
        out = jax.block_until_ready(out)

        ref = temporal_encoding_ref(x, time_indices, pe_full)
        assert out.shape == (B, S, D)
        assert jnp.allclose(out, ref, atol=1e-5, rtol=1e-5), \
            f"mismatch vs reference for shape {(B, S, D)}"

    print("KERNEL_OK")
</pallas_src>

<mosaic_0001>
module attributes {stable_mosaic.version = 11 : i64} {
  func.func @_temporal_encoding_kernel(%arg0: i32, %arg1: i32, %arg2: i32, %arg3: memref<1x8x32xf32, #tpu.memory_space<vmem>>, %arg4: memref<1x8x1xf32, #tpu.memory_space<vmem>>, %arg5: memref<8x32xf32, #tpu.memory_space<vmem>>, %arg6: memref<1x8x32xf32, #tpu.memory_space<vmem>>) attributes {dimension_semantics = [#tpu.dimension_semantics<parallel>, #tpu.dimension_semantics<parallel>, #tpu.dimension_semantics<parallel>], iteration_bounds = array<i64: 1, 1, 2>, scalar_prefetch = 0 : i64, scratch_operands = 0 : i64, tpu.core_type = #tpu.core_type<tc>, window_params = [{transform_indices = @transform_0, window_bounds = array<i64: 1, 8, 32>}, {transform_indices = @transform_1, window_bounds = array<i64: 1, 8, 1>}, {transform_indices = @transform_2, window_bounds = array<i64: 8, 32>}, {transform_indices = @transform_3, window_bounds = array<i64: 1, 8, 32>}]} {
    %c0 = arith.constant 0 : index
    %c0_0 = arith.constant 0 : index
    %c0_1 = arith.constant 0 : index
    %0 = vector.load %arg3[%c0, %c0_0, %c0_1] : memref<1x8x32xf32, #tpu.memory_space<vmem>>, vector<1x8x32xf32>
    %c0_2 = arith.constant 0 : index
    %c0_3 = arith.constant 0 : index
    %c0_4 = arith.constant 0 : index
    %1 = vector.load %arg4[%c0_2, %c0_3, %c0_4] : memref<1x8x1xf32, #tpu.memory_space<vmem>>, vector<1x8x1xf32>
    %c0_5 = arith.constant 0 : index
    %c0_6 = arith.constant 0 : index
    %2 = vector.load %arg5[%c0_5, %c0_6] : memref<8x32xf32, #tpu.memory_space<vmem>>, vector<8x32xf32>
    %3 = vector.shape_cast %2 : vector<8x32xf32> to vector<1x8x32xf32>
    %4 = vector.broadcast %1 : vector<1x8x1xf32> to vector<1x8x32xf32>
    %5 = arith.mulf %3, %4 : vector<1x8x32xf32>
    %6 = arith.addf %0, %5 : vector<1x8x32xf32>
    %c0_7 = arith.constant 0 : index
    %c0_8 = arith.constant 0 : index
    %c0_9 = arith.constant 0 : index
    %7 = vector.load %arg6[%c0_7, %c0_8, %c0_9] : memref<1x8x32xf32, #tpu.memory_space<vmem>>, vector<1x8x32xf32>
    tpu.vector_store %arg6[%c0_7, %c0_8, %c0_9], %6 {strides = array<i32>} : memref<1x8x32xf32, #tpu.memory_space<vmem>>, vector<1x8x32xf32>,
    return
  }
  func.func @transform_0(%arg0: i32, %arg1: i32, %arg2: i32) -> (i32, i32, i32) {
    %c0_i32 = arith.constant 0 : i32
    return %arg2, %arg0, %arg1 : i32, i32, i32
  }
  func.func @transform_1(%arg0: i32, %arg1: i32, %arg2: i32) -> (i32, i32, i32) {
    %c0_i32 = arith.constant 0 : i32
    %c0_i32_0 = arith.constant 0 : i32
    return %arg2, %arg0, %c0_i32 : i32, i32, i32
  }
  func.func @transform_2(%arg0: i32, %arg1: i32, %arg2: i32) -> (i32, i32) {
    %c0_i32 = arith.constant 0 : i32
    return %arg0, %arg1 : i32, i32
  }
  func.func @transform_3(%arg0: i32, %arg1: i32, %arg2: i32) -> (i32, i32, i32) {
    %c0_i32 = arith.constant 0 : i32
    return %arg2, %arg0, %arg1 : i32, i32, i32
  }
}

</mosaic_0001>

<llo_original>
// kernel: tpu_custom_call.1
$region0: #{tpu_custom_call.1}
  #allocation0 [shape = 'u32[]', space=smem, size = 0x4, offset = 0x4, fixed_abs, tag = 'smem constant byte address 0x4 - core index']
  #allocation1 [shape = 'u32[72,128]{1,0:T(1,128)}', space=vmem, size = 0x9000, scoped, tag = 'internal scratch']
  %s0 = inlined_call_operand.vmem [shape: f32[2,8,32], index: 0, kind: input, shape index: {}]
  %s1 = inlined_call_operand.vmem [shape: f32[2,8,1], index: 1, kind: input, shape index: {}]
  %s2 = inlined_call_operand.hbm [shape: f32[8,32], index: 2, kind: input, shape index: {}]
  %s3 = inlined_call_operand.hbm [shape: f32[2,8,32], index: 3, kind: output, shape index: {}]
  %s4 = sld [smem:[#allocation0]]
  $region49: #{tpu_custom_call.1} parent=0
    _
  %s6 = ssub.s32 1, %s4
  %s7 = scalar_select 0, %s6, %s4
  $region1: #{tpu_custom_call.1} parent=0
    #allocation2 [shape = 'u8[4096]{0}', space=vmem, size = 0x1000, scoped, tag = 'input window, operand 2, single buffered']
    #allocation3 [shape = 's32[2]{0}', space=sflag, size = 0x8, scoped, tag = 'scoped memory for tpu_custom_call.1']
    #allocation4 [shape = 's32[2]{0}', space=sflag, size = 0x8, scoped, tag = 'scoped memory for tpu_custom_call.1']
    #allocation5 [shape = 'u8[8192]{0}', space=vmem, size = 0x2000, scoped, tag = 'output window, operand 0']
    %8 = vsyncpa [#allocation3], 0
    %9 = vsyncpa [#allocation4], 0
    %s10 = scalar_lea.sflag [#allocation4], 1
    %11 = vsyncpa %s10, 0
    loop: start=0, step=1, limit=4
    $region2: #{tpu_custom_call.1} parent=1 // loop_pre_header
      _
    $region3: #{tpu_custom_call.1} parent=1 // loop_header
      %s13 = sphi 0, %s17
      %p14 = scmp.ge.s32.totalorder %s13, 4
      %s20 = sphi 0, %s39
      %s21 = sphi 0, %s35
      %s22 = sphi 0, %s31
      %s23 = sphi 0, %s20
      %s24 = sphi 0, %s21
      %s25 = sphi 0, %s22
      %s26 = sphi 0, %s23
      %s27 = sphi 0, %s24
      %s28 = sphi 0, %s25
      %s46 = sphi 0, %s48
      %s49 = sphi 0, %s46
      %s50 = sphi 0, %s49
      %s66 = sphi 0, %s50
      %s74 = sphi 0, %s76
      %s77 = sphi 0, %s74
      %s78 = sphi 0, %s77
      %s94 = sphi 0, %s78
      %s102 = sphi 0, %s104
      %s105 = sphi 0, %s102
      %s106 = sphi 0, %s105
      %s122 = sphi 0, %s106
      %s132 = sphi 0, %s134
      %s135 = sphi 0, %s132
      %s136 = sphi 0, %s135
      %s152 = sphi 0, %s136
    $region4: #{tpu_custom_call.1} parent=1 // loop_header_branch
      %16 = sbr.rel (%p14) target = $region8
    $region5: #{tpu_custom_call.1} parent=1 // loop_body
      %s18 = ssub.s32 %s13, 1
      %s19 = ssub.s32 %s13, 2
      %s29 = sadd.s32 1, %s22
      %p30 = scmp.ge.s32.totalorder %s29, 2
      %s31 = scalar_select %p30, 0, %s29
      %s32 = sadd.s32 1, %s21
      %s33 = scalar_select %p30, %s32, %s21
      %p34 = scmp.ge.s32.totalorder %s33, 1
      %s35 = scalar_select %p34, 0, %s33
      %s36 = sadd.s32 1, %s20
      %s37 = scalar_select %p34, %s36, %s20
      %p38 = scmp.ge.s32.totalorder %s37, 1
      %s39 = scalar_select %p38, 0, %s37
      %s40 = ssub.s32 %s22, %s31
      %s41 = ssub.s32 %s20, %s39
      %s42 = sor.u32 %s40, %s41
      %s43 = ssub.s32 %s21, %s35
      %s44 = sor.u32 %s42, %s43
      %p45 = scmp.eq.s32.totalorder %s44, 0
      %s47 = sadd.s32 %s46, 1
      %s48 = scalar_select %p45, %s46, %s47
      %p51 = pneg %p45
      %p52 = scmp.eq.s32.totalorder %s13, 1
      %p53 = por %p51, %p52
      %p54 = scmp.ne.s32.totalorder %s46, %s49
      %p55 = scmp.eq.s32.totalorder %s13, 0
      %p56 = por %p54, %p55
      %p57 = scmp.ne.s32.totalorder %s46, %s49
      %p58 = scmp.eq.s32.totalorder %s18, 1
      %p59 = por %p57, %p58
      %p60 = scmp.ne.s32.totalorder %s49, %s50
      %p61 = scmp.eq.s32.totalorder %s18, 0
      %p62 = por %p60, %p61
      %p63 = scmp.ne.s32.totalorder %s49, %s50
      %p64 = scmp.eq.s32.totalorder %s19, 1
      %p65 = por %p63, %p64
      %p67 = scmp.ne.s32.totalorder %s50, %s66
      %p68 = scmp.eq.s32.totalorder %s19, 0
      %p69 = por %p67, %p68
      %s70 = ssub.s32 %s22, %s31
      %s71 = ssub.s32 %s20, %s39
      %s72 = sor.u32 %s70, %s71
      %p73 = scmp.eq.s32.totalorder %s72, 0
      %s75 = sadd.s32 %s74, 1
      %s76 = scalar_select %p73, %s74, %s75
      %p79 = pneg %p73
      %p80 = scmp.eq.s32.totalorder %s13, 1
      %p81 = por %p79, %p80
      %p82 = scmp.ne.s32.totalorder %s74, %s77
      %p83 = scmp.eq.s32.totalorder %s13, 0
      %p84 = por %p82, %p83
      %p85 = scmp.ne.s32.totalorder %s74, %s77
      %p86 = scmp.eq.s32.totalorder %s18, 1
      %p87 = por %p85, %p86
      %p88 = scmp.ne.s32.totalorder %s77, %s78
      %p89 = scmp.eq.s32.totalorder %s18, 0
      %p90 = por %p88, %p89
      %p91 = scmp.ne.s32.totalorder %s77, %s78
      %p92 = scmp.eq.s32.totalorder %s19, 1
      %p93 = por %p91, %p92
      %p95 = scmp.ne.s32.totalorder %s78, %s94
      %p96 = scmp.eq.s32.totalorder %s19, 0
      %p97 = por %p95, %p96
      %s98 = ssub.s32 %s20, %s39
      %s99 = ssub.s32 %s21, %s35
      %s100 = sor.u32 %s98, %s99
      %p101 = scmp.eq.s32.totalorder %s100, 0
      %s103 = sadd.s32 %s102, 1
      %s104 = scalar_select %p101, %s102, %s103
      %p107 = pneg %p101
      %p108 = scmp.eq.s32.totalorder %s13, 1
      %p109 = por %p107, %p108
      %p110 = scmp.ne.s32.totalorder %s102, %s105
      %p111 = scmp.eq.s32.totalorder %s13, 0
      %p112 = por %p110, %p111
      %p113 = scmp.ne.s32.totalorder %s102, %s105
      %p114 = scmp.eq.s32.totalorder %s18, 1
      %p115 = por %p113, %p114
      %p116 = scmp.ne.s32.totalorder %s105, %s106
      %p117 = scmp.eq.s32.totalorder %s18, 0
      %p118 = por %p116, %p117
      %p119 = scmp.ne.s32.totalorder %s105, %s106
      %p120 = scmp.eq.s32.totalorder %s19, 1
      %p121 = por %p119, %p120
      %p123 = scmp.ne.s32.totalorder %s106, %s122
      %p124 = scmp.eq.s32.totalorder %s19, 0
      %p125 = por %p123, %p124
      %s126 = ssub.s32 %s22, %s31
      %s127 = ssub.s32 %s20, %s39
      %s128 = sor.u32 %s126, %s127
      %s129 = ssub.s32 %s21, %s35
      %s130 = sor.u32 %s128, %s129
      %p131 = scmp.eq.s32.totalorder %s130, 0
      %s133 = sadd.s32 %s132, 1
      %s134 = scalar_select %p131, %s132, %s133
      %p137 = pneg %p131
      %p138 = scmp.eq.s32.totalorder %s13, 1
      %p139 = por %p137, %p138
      %p140 = scmp.ne.s32.totalorder %s132, %s135
      %p141 = scmp.eq.s32.totalorder %s13, 0
      %p142 = por %p140, %p141
      %p143 = scmp.ne.s32.totalorder %s132, %s135
      %p144 = scmp.eq.s32.totalorder %s18, 1
      %p145 = por %p143, %p144
      %p146 = scmp.ne.s32.totalorder %s135, %s136
      %p147 = scmp.eq.s32.totalorder %s18, 0
      %p148 = por %p146, %p147
      %p149 = scmp.ne.s32.totalorder %s135, %s136
      %p150 = scmp.eq.s32.totalorder %s19, 1
      %p151 = por %p149, %p150
      %p153 = scmp.ne.s32.totalorder %s136, %s152
      %p154 = scmp.eq.s32.totalorder %s19, 0
      %p155 = por %p153, %p154
      %p156 = scmp.le.s32.totalorder 1, %s13
      %p157 = scmp.lt.s32.totalorder %s13, 3
      %p158 = pnand %p156, %p157
      %p159 = pneg %p158
      // Predicated region
      $region9: #{tpu_custom_call.1} parent=5 // pred_check
        _
      $region10: #{tpu_custom_call.1} parent=5 // pred_check_branch
        %161 = sbr.rel (%p158) target = $region12
      $region11: #{tpu_custom_call.1} parent=5 // pred_region
        %s162 = ssub.s32 %s13, 1
        // Predicated region
        $region13: #{tpu_custom_call.1} parent=11 // pred_check
          %p163 = pneg %p118
        $region14: #{tpu_custom_call.1} parent=11 // pred_check_branch
          %165 = sbr.rel (%p163) target = $region16
        $region15: #{tpu_custom_call.1} parent=11 // pred_region
          %167 = vsyncadd [#allocation3], 0
          %s168 = sadd.s32 %s24, %s23
          %s169 = smul.addr %s168, 8
          %s170 = scalar_lea.hbm %s2, %s169
          %s172 = sshll.u32 %s170, 4
          %s173 = int_to_ptr.hbm [resolvable:$true] %s172
          %s174 = sshll.u32 [#allocation2], 4
          %s175 = int_to_ptr.vmem [resolvable:$true] %s174
          %177 = dma.hbm_to_vmem [thread:$0]  %s173, 128, %s175, [#allocation3]
        $region16: #{tpu_custom_call.1} parent=11 // pred_fallthru
          _
      $region12: #{tpu_custom_call.1} parent=5 // pred_fallthru
        _
      %p178 = scmp.lt.s32.totalorder %s13, 2
      // Predicated region
      $region17: #{tpu_custom_call.1} parent=5 // pred_check
        %p179 = pneg %p178
      $region18: #{tpu_custom_call.1} parent=5 // pred_check_branch
        %181 = sbr.rel (%p179) target = $region20
      $region19: #{tpu_custom_call.1} parent=5 // pred_region
        // Predicated region
        $region21: #{tpu_custom_call.1} parent=19 // pred_check
          %p182 = pneg %p56
        $region22: #{tpu_custom_call.1} parent=19 // pred_check_branch
          %184 = sbr.rel (%p182) target = $region24
        $region23: #{tpu_custom_call.1} parent=19 // pred_region
          %p185 = scmp.lt.s32.totalorder %s22, 1
          %s186 = scalar_select %p185, %s22, 1
          %p187 = scmp.lt.s32.totalorder %s20, 0
          %s188 = scalar_select %p187, %s20, 0
          %p189 = scmp.lt.s32.totalorder %s21, 0
          %s190 = scalar_select %p189, %s21, 0
          %s191 = sadd.s32 %s190, %s188
          %s192 = sadd.s32 %s191, %s186
          %s193 = smul.addr %s192, 8
          %s194 = scalar_lea.vmem %s0, %s193
        $region24: #{tpu_custom_call.1} parent=19 // pred_fallthru
          _
        // Predicated region
        $region25: #{tpu_custom_call.1} parent=19 // pred_check
          %p195 = pneg %p84
        $region26: #{tpu_custom_call.1} parent=19 // pred_check_branch
          %197 = sbr.rel (%p195) target = $region28
        $region27: #{tpu_custom_call.1} parent=19 // pred_region
          %p198 = scmp.lt.s32.totalorder %s22, 1
          %s199 = scalar_select %p198, %s22, 1
          %p200 = scmp.lt.s32.totalorder %s20, 0
          %s201 = scalar_select %p200, %s20, 0
          %s202 = sadd.s32 %s201, %s199
          %s203 = smul.addr %s202, 8
          %s204 = scalar_lea.vmem %s1, %s203
        $region28: #{tpu_custom_call.1} parent=19 // pred_fallthru
          _
      $region20: #{tpu_custom_call.1} parent=5 // pred_fallthru
        _
      %p205 = scmp.le.s32.totalorder 1, %s13
      %p206 = scmp.lt.s32.totalorder %s13, 3
      %p207 = pnand %p205, %p206
      %p208 = pneg %p207
      // Predicated region
      $region29: #{tpu_custom_call.1} parent=5 // pred_check
        _
      $region30: #{tpu_custom_call.1} parent=5 // pred_check_branch
        %210 = sbr.rel (%p207) target = $region32
      $region31: #{tpu_custom_call.1} parent=5 // pred_region
        %s211 = ssub.s32 %s13, 1
        // Predicated region
        $region33: #{tpu_custom_call.1} parent=31 // pred_check
          %p212 = pneg %p118
        $region34: #{tpu_custom_call.1} parent=31 // pred_check_branch
          %214 = sbr.rel (%p212) target = $region36
        $region35: #{tpu_custom_call.1} parent=31 // pred_region
          %216 = dma.done [#allocation3], 128
        $region36: #{tpu_custom_call.1} parent=31 // pred_fallthru
          _
        %p217 = scmp.lt.s32.totalorder %s25, 1
        %s218 = scalar_select %p217, %s25, 1
        %p219 = scmp.lt.s32.totalorder %s23, 0
        %s220 = scalar_select %p219, %s23, 0
        %p221 = scmp.lt.s32.totalorder %s24, 0
        %s222 = scalar_select %p221, %s24, 0
        %s223 = sadd.s32 %s222, %s220
        %s224 = sadd.s32 %s223, %s218
        %s225 = smul.addr %s224, 8
        %s226 = scalar_lea.vmem %s0, %s225
        %p227 = pneg %p62
        %p228 = pneg %p59
        %p229 = scmp.lt.s32.totalorder %s25, 1
        %s230 = scalar_select %p229, %s25, 1
        %p231 = scmp.lt.s32.totalorder %s23, 0
        %s232 = scalar_select %p231, %s23, 0
        %s233 = sadd.s32 %s232, %s230
        %s234 = smul.addr %s233, 8
        %s235 = scalar_lea.vmem %s1, %s234
        %p236 = pneg %p90
        %p237 = pneg %p87
        %p238 = pneg %p118
        %p239 = pneg %p115
        %p240 = pneg %p148
        %p241 = pneg %p145
        %s242 = sand.u32 %s135, 1
        %s243 = scalar_lea.sflag [#allocation4], %s242
        %s244 = sand.u32 %s135, 1
        %s245 = smul.addr %s244, 8
        %s246 = scalar_lea.vmem [#allocation5], %s245
        %p247 = scmp.lt.s32.totalorder %s25, 1
        %s248 = scalar_select %p247, %s25, 1
        %p249 = scmp.lt.s32.totalorder %s23, 0
        %s250 = scalar_select %p249, %s23, 0
        %p251 = scmp.lt.s32.totalorder %s24, 0
        %s252 = scalar_select %p251, %s24, 0
        %s253 = sadd.s32 %s252, %s250
        %s254 = sadd.s32 %s253, %s248
        %s255 = smul.addr %s254, 8
        %s256 = scalar_lea.vmem %s0, %s255
        %p257 = scmp.lt.s32.totalorder %s25, 1
        %s258 = scalar_select %p257, %s25, 1
        %p259 = scmp.lt.s32.totalorder %s23, 0
        %s260 = scalar_select %p259, %s23, 0
        %s261 = sadd.s32 %s260, %s258
        %s262 = smul.addr %s261, 8
        %s263 = scalar_lea.vmem %s1, %s262
        %v264 = vld [vmem:[%s256] sm:$0xff]
        %v265 = vld [vmem:[%s263] sm:$0xff]
        %v266 = vld [vmem:[#allocation2] sm:$0xff]
        %268 = vset.pattern.permute.xlu0 0
        %269 = vperm.xlu0 %268, %v265
        %v270 = vpop.permute.xlu0 %269
        %v272 = vmul.f32 %v266, %v270
        %v273 = vadd.f32 %v264, %v272
        %vm274 = vcmask 261120
        %275 = vst.msk [vmem:[%s246] sm:$0xff] %vm274, %v273
        %s276 = sand.u32 %s135, 1
        %s277 = scalar_lea.sflag [#allocation4], %s276
        %s278 = sand.u32 %s135, 1
        %s279 = smul.addr %s278, 8
        %s280 = scalar_lea.vmem [#allocation5], %s279
        // Predicated region
        $region37: #{tpu_custom_call.1} parent=31 // pred_check
          %p281 = pneg %p145
        $region38: #{tpu_custom_call.1} parent=31 // pred_check_branch
          %283 = sbr.rel (%p281) target = $region40
        $region39: #{tpu_custom_call.1} parent=31 // pred_region
          %285 = vsyncadd %s277, 0
          %s286 = sadd.s32 %s24, %s23
          %s287 = sadd.s32 %s286, %s25
          %s288 = smul.addr %s287, 8
          %s289 = scalar_lea.hbm %s3, %s288
          %s291 = sshll.u32 %s280, 4
          %s292 = int_to_ptr.vmem [resolvable:$true] %s291
          %s293 = sshll.u32 %s289, 4
          %s294 = int_to_ptr.hbm [resolvable:$true] %s293
          %296 = dma.vmem_to_hbm [thread:$0]  %s292, 128, %s294, %s277
        $region40: #{tpu_custom_call.1} parent=31 // pred_fallthru
          _
      $region32: #{tpu_custom_call.1} parent=5 // pred_fallthru
        _
      %p297 = scmp.le.s32.totalorder 2, %s13
      // Predicated region
      $region41: #{tpu_custom_call.1} parent=5 // pred_check
        %p298 = pneg %p297
      $region42: #{tpu_custom_call.1} parent=5 // pred_check_branch
        %300 = sbr.rel (%p298) target = $region44
      $region43: #{tpu_custom_call.1} parent=5 // pred_region
        %s301 = ssub.s32 %s13, 2
        // Predicated region
        $region45: #{tpu_custom_call.1} parent=43 // pred_check
          %p302 = pneg %p151
        $region46: #{tpu_custom_call.1} parent=43 // pred_check_branch
          %304 = sbr.rel (%p302) target = $region48
        $region47: #{tpu_custom_call.1} parent=43 // pred_region
          %s305 = sand.u32 %s136, 1
          %s306 = scalar_lea.sflag [#allocation4], %s305
          %s307 = sand.u32 %s136, 1
          %s308 = smul.addr %s307, 8
          %s309 = scalar_lea.vmem [#allocation5], %s308
          %311 = dma.done %s306, 128
        $region48: #{tpu_custom_call.1} parent=43 // pred_fallthru
          _
      $region44: #{tpu_custom_call.1} parent=5 // pred_fallthru
        _
    $region6: #{tpu_custom_call.1} parent=1 // loop_footer
      %s17 = sadd.s32 1, %s13
    $region7: #{tpu_custom_call.1} parent=1 // loop_footer_branch
      %12 = sbr.rel target = $region3
    $region8: #{tpu_custom_call.1} parent=1 // loop_exit
      _
    %312 = vsyncpa [#allocation3], 1
    %s313 = scalar_lea.sflag [#allocation3], 1
    %314 = vsyncpa %s313, 1
    %315 = vsyncpa [#allocation4], 1
    %s316 = scalar_lea.sflag [#allocation4], 1
    %317 = vsyncpa %s316, 1

</llo_original>
